<compile_context>
chip_gen: v5e
topology: v5e:2x2
jax: 0.10.0
libtpu: 0.0.40
codegen_flags: <defaults>
</compile_context>

<pallas_src>
import jax
import jax.numpy as jnp
from jax.experimental import pallas as pl
from jax.experimental.pallas import tpu as pltpu


def _round_up(a, b):
    return (a + b - 1) // b * b


# --------------------------------------------------------------------------------------
# Pass 1: per-edge messages  msg = relu(x[src] + edge_mlp(edge_attr))
# --------------------------------------------------------------------------------------
def edge_msg_kernel(x_ref,              # VMEM (N_p, D_in_p)   resident across the grid
                    attr_ref,           # VMEM (TE, A_p)       edge-attr tile
                    src_ref,            # VMEM (TE, 1) int32   source node ids (-1 = pad)
                    we1_ref, be1_ref,   # edge MLP layer 1: (A_p, D_in_p), (1, D_in_p)
                    we2_ref, be2_ref,   # edge MLP layer 2: (D_in_p, D_in_p), (1, D_in_p)
                    msg_ref):           # VMEM (TE, D_in_p)    output messages
    # Edge-embedding MLP: Linear -> ReLU -> Linear on this edge tile.
    attr = attr_ref[...]
    eh = jnp.maximum(
        jnp.dot(attr, we1_ref[...], preferred_element_type=jnp.float32) + be1_ref[...], 0.0)
    e = jnp.dot(eh, we2_ref[...], preferred_element_type=jnp.float32) + be2_ref[...]

    # Gather x[src] via an on-the-fly one-hot (built with VPU compares, consumed by the MXU).
    x_all = x_ref[...]                              # [N_p, D_in_p]
    src = src_ref[...]                              # [TE, 1] int32
    te = src.shape[0]
    n_p = x_all.shape[0]
    src_oh = (jax.lax.broadcasted_iota(jnp.int32, (te, n_p), 1) == src).astype(jnp.float32)
    xj = jnp.dot(src_oh, x_all, preferred_element_type=jnp.float32)     # [TE, D_in_p]

    msg_ref[...] = jnp.maximum(xj + e, 0.0)         # GINE message, relu(x_j + e)


# --------------------------------------------------------------------------------------
# Pass 2: scatter-add messages to destinations, GINE combine, node MLP
# --------------------------------------------------------------------------------------
def gine_agg_kernel(eps_ref,            # SMEM (1, 1) f32  : GINE eps (train_eps, init 0)
                    x_ref,              # VMEM (TN, D_in_p)    node-feature tile
                    msg_ref,            # VMEM (TE, D_in_p)    message tile
                    dst_ref,            # VMEM (1, TE) int32   dest node ids (-1 = pad)
                    w1_ref, b1_ref,     # node MLP layer 1: (D_in_p, D_emb_p), (1, D_emb_p)
                    w2_ref, b2_ref,     # node MLP layer 2: (D_emb_p, D_emb_p), (1, D_emb_p)
                    out_ref,            # VMEM (TN, D_emb_p)
                    acc_ref):           # VMEM scratch (TN, D_in_p) f32 : aggregated messages
    i = pl.program_id(0)                # node tile (parallel)
    k = pl.program_id(1)                # edge tile (reduction)
    nk = pl.num_programs(1)

    @pl.when(k == 0)
    def _():
        acc_ref[...] = jnp.zeros_like(acc_ref)

    # Scatter-add into the current node tile via an on-the-fly one-hot.
    msg = msg_ref[...]                  # [TE, D_in_p]
    dst = dst_ref[...]                  # [1, TE] int32
    tn = acc_ref.shape[0]
    te = msg.shape[0]
    node_ids = i * tn + jax.lax.broadcasted_iota(jnp.int32, (tn, te), 0)
    dst_oh = (node_ids == dst).astype(jnp.float32)  # [TN, TE]; pad edges (-1) hit no node
    acc_ref[...] += jnp.dot(dst_oh, msg, preferred_element_type=jnp.float32)

    # Finalize: GINE combine + node MLP for this node tile.
    @pl.when(k == nk - 1)
    def _():
        eps = eps_ref[0, 0]
        h = (1.0 + eps) * x_ref[...] + acc_ref[...]
        z = jnp.maximum(
            jnp.dot(h, w1_ref[...], preferred_element_type=jnp.float32) + b1_ref[...], 0.0)
        out = jnp.dot(z, w2_ref[...], preferred_element_type=jnp.float32) + b2_ref[...]
        out_ref[...] = out.astype(out_ref.dtype)


def alchemy_gine_forward(x, edge_index, edge_attr, params, *, tn=None, te=None):
    """x: [N, in_dim] f32, edge_index: [2, E] int32, edge_attr: [E, num_edge_emb] f32."""
    N, in_dim = x.shape
    E = edge_index.shape[1]
    A = edge_attr.shape[1]
    emb_dim = params["w1"].shape[1]

    LANE, SUB = 128, 8
    if tn is None:
        tn = min(256, _round_up(N, SUB))
    if te is None:
        te = min(512, _round_up(E, LANE))
    assert tn % SUB == 0 and te % LANE == 0

    d_in_p = _round_up(in_dim, LANE)
    d_emb_p = _round_up(emb_dim, LANE)
    a_p = _round_up(A, LANE)
    n_p = _round_up(N, tn)
    e_p = _round_up(E, te)
    ni, nk = n_p // tn, e_p // te

    f32 = jnp.float32
    # Zero-pad to lane-dense shapes. Padded lanes stay exactly zero through the whole pipeline
    # (zero weight rows/cols, zero biases); padded edges carry index -1 and land nowhere.
    x_p = jnp.zeros((n_p, d_in_p), f32).at[:N, :in_dim].set(x)
    attr_p = jnp.zeros((e_p, a_p), f32).at[:E, :A].set(edge_attr)
    src_p = jnp.full((e_p, 1), -1, jnp.int32).at[:E, 0].set(edge_index[0])
    dst_p = jnp.full((1, e_p), -1, jnp.int32).at[0, :E].set(edge_index[1])

    def pad_mat(w, r, c):
        return jnp.zeros((r, c), f32).at[:w.shape[0], :w.shape[1]].set(w)

    def pad_row(b, c):
        return jnp.zeros((1, c), f32).at[:, :b.shape[1]].set(b)

    we1 = pad_mat(params["we1"], a_p, d_in_p)
    be1 = pad_row(params["be1"], d_in_p)
    we2 = pad_mat(params["we2"], d_in_p, d_in_p)
    be2 = pad_row(params["be2"], d_in_p)
    w1 = pad_mat(params["w1"], d_in_p, d_emb_p)
    b1 = pad_row(params["b1"], d_emb_p)
    w2 = pad_mat(params["w2"], d_emb_p, d_emb_p)
    b2 = pad_row(params["b2"], d_emb_p)

    # ---------------- Pass 1: per-edge messages ----------------
    flops1 = int(2 * e_p * (a_p * d_in_p + d_in_p * d_in_p) + 2 * e_p * n_p * d_in_p)
    bytes1 = int(4 * (n_p * d_in_p + e_p * a_p + e_p + a_p * d_in_p + d_in_p * d_in_p
                      + 2 * d_in_p + e_p * d_in_p))
    msg_p = pl.pallas_call(
        edge_msg_kernel,
        out_shape=jax.ShapeDtypeStruct((e_p, d_in_p), jnp.float32),
        grid_spec=pltpu.PrefetchScalarGridSpec(
            num_scalar_prefetch=0,
            grid=(nk,),
            in_specs=[
                pl.BlockSpec((n_p, d_in_p), lambda k: (0, 0)),      # x, resident
                pl.BlockSpec((te, a_p), lambda k: (k, 0)),          # edge_attr tile
                pl.BlockSpec((te, 1), lambda k: (k, 0)),            # src ids tile
                pl.BlockSpec((a_p, d_in_p), lambda k: (0, 0)),      # edge MLP layer 1
                pl.BlockSpec((1, d_in_p), lambda k: (0, 0)),
                pl.BlockSpec((d_in_p, d_in_p), lambda k: (0, 0)),   # edge MLP layer 2
                pl.BlockSpec((1, d_in_p), lambda k: (0, 0)),
            ],
            out_specs=pl.BlockSpec((te, d_in_p), lambda k: (k, 0)),
        ),
        compiler_params=pltpu.CompilerParams(
            dimension_semantics=("parallel",),
            vmem_limit_bytes=32 * 1024 * 1024,
        ),
        cost_estimate=pl.CostEstimate(flops=flops1, transcendentals=0, bytes_accessed=bytes1),
    )(x_p, attr_p, src_p, we1, be1, we2, be2)

    # ---------------- Pass 2: scatter-add + GINE combine + node MLP ----------------
    flops2 = int(2 * n_p * e_p * d_in_p
                 + 2 * n_p * (d_in_p * d_emb_p + d_emb_p * d_emb_p))
    bytes2 = int(4 * (n_p * d_in_p + ni * e_p * d_in_p + ni * e_p
                      + d_in_p * d_emb_p + d_emb_p * d_emb_p + 2 * d_emb_p
                      + n_p * d_emb_p))

    def full(shape):
        return pl.BlockSpec(shape, lambda i, k: (0, 0))

    out_p = pl.pallas_call(
        gine_agg_kernel,
        out_shape=jax.ShapeDtypeStruct((n_p, d_emb_p), jnp.float32),
        grid_spec=pltpu.PrefetchScalarGridSpec(
            num_scalar_prefetch=0,
            grid=(ni, nk),
            in_specs=[
                pl.BlockSpec(memory_space=pltpu.MemorySpace.SMEM),  # eps (1, 1)
                pl.BlockSpec((tn, d_in_p), lambda i, k: (i, 0)),    # x tile
                pl.BlockSpec((te, d_in_p), lambda i, k: (k, 0)),    # msg tile
                pl.BlockSpec((1, te), lambda i, k: (0, k)),         # dst ids tile
                full((d_in_p, d_emb_p)), full((1, d_emb_p)),        # node MLP layer 1
                full((d_emb_p, d_emb_p)), full((1, d_emb_p)),       # node MLP layer 2
            ],
            out_specs=pl.BlockSpec((tn, d_emb_p), lambda i, k: (i, 0)),
            scratch_shapes=[pltpu.VMEM((tn, d_in_p), jnp.float32)],
        ),
        compiler_params=pltpu.CompilerParams(
            dimension_semantics=("parallel", "arbitrary"),
            vmem_limit_bytes=32 * 1024 * 1024,
        ),
        cost_estimate=pl.CostEstimate(flops=flops2, transcendentals=0, bytes_accessed=bytes2),
    )(params["eps"], x_p, msg_p, dst_p, w1, b1, w2, b2)

    return out_p[:N, :emb_dim]


def reference_forward(x, edge_index, edge_attr, params):
    """Pure-JAX reference mirroring the PyTorch module."""
    e = jnp.maximum(edge_attr @ params["we1"] + params["be1"], 0.0) @ params["we2"] + params["be2"]
    msg = jnp.maximum(x[edge_index[0]] + e, 0.0)
    aggr = jnp.zeros_like(x).at[edge_index[1]].add(msg)
    h = (1.0 + params["eps"][0, 0]) * x + aggr
    z = jnp.maximum(h @ params["w1"] + params["b1"], 0.0)
    return z @ params["w2"] + params["b2"]


def init_params(key, in_dim, emb_dim, num_edge_emb):
    ks = jax.random.split(key, 8)

    def lin(kw, kb, fan_in, fan_out):
        s = 1.0 / (fan_in ** 0.5)
        w = jax.random.uniform(kw, (fan_in, fan_out), jnp.float32, -s, s)
        b = jax.random.uniform(kb, (1, fan_out), jnp.float32, -s, s)
        return w, b

    we1, be1 = lin(ks[0], ks[1], num_edge_emb, in_dim)
    we2, be2 = lin(ks[2], ks[3], in_dim, in_dim)
    w1, b1 = lin(ks[4], ks[5], in_dim, emb_dim)
    w2, b2 = lin(ks[6], ks[7], emb_dim, emb_dim)
    return {
        "eps": jnp.zeros((1, 1), jnp.float32),   # train_eps=True -> eps initialized to 0
        "we1": we1, "be1": be1, "we2": we2, "be2": be2,
        "w1": w1, "b1": b1, "w2": w2, "b2": b2,
    }


if __name__ == "__main__":
    N, E = 16, 32
    IN_DIM, EMB_DIM, NUM_EDGE_EMB = 8, 32, 4

    key = jax.random.PRNGKey(0)
    k_x, k_src, k_dst, k_type, k_param = jax.random.split(key, 5)

    x = jax.random.normal(k_x, (N, IN_DIM), jnp.float32)
    src = jax.random.randint(k_src, (E,), 0, N, dtype=jnp.int32)
    dst = jax.random.randint(k_dst, (E,), 0, N, dtype=jnp.int32)
    edge_index = jnp.stack([src, dst], axis=0)                               # [2, E]
    bond_type = jax.random.randint(k_type, (E,), 0, NUM_EDGE_EMB, dtype=jnp.int32)
    edge_attr = jax.nn.one_hot(bond_type, NUM_EDGE_EMB, dtype=jnp.float32)   # [E, 4] float feats

    params = init_params(k_param, IN_DIM, EMB_DIM, NUM_EDGE_EMB)

    out = alchemy_gine_forward(x, edge_index, edge_attr, params)
    jax.block_until_ready(out)
    assert out.shape == (N, EMB_DIM) and out.dtype == jnp.float32

    ref = reference_forward(x, edge_index, edge_attr, params)
    err = float(jnp.max(jnp.abs(out - ref)))
    assert err < 1e-3, f"max abs err {err}"
    print("KERNEL_OK")
</pallas_src>

<mosaic_0001>
module attributes {stable_mosaic.version = 11 : i64} {
  func.func @edge_msg_kernel(%arg0: i32, %arg1: memref<16x128xf32, #tpu.memory_space<vmem>>, %arg2: memref<128x128xf32, #tpu.memory_space<vmem>>, %arg3: memref<128x1xi32, #tpu.memory_space<vmem>>, %arg4: memref<128x128xf32, #tpu.memory_space<vmem>>, %arg5: memref<1x128xf32, #tpu.memory_space<vmem>>, %arg6: memref<128x128xf32, #tpu.memory_space<vmem>>, %arg7: memref<1x128xf32, #tpu.memory_space<vmem>>, %arg8: memref<128x128xf32, #tpu.memory_space<vmem>>) attributes {dimension_semantics = [#tpu.dimension_semantics<parallel>], iteration_bounds = array<i64: 1>, scalar_prefetch = 0 : i64, scratch_operands = 0 : i64, tpu.core_type = #tpu.core_type<tc>, window_params = [{pipeline_mode = #tpu.pipeline_mode<synchronous>, transform_indices = @transform_0, window_bounds = array<i64: 16, 128>}, {transform_indices = @transform_1, window_bounds = array<i64: 128, 128>}, {transform_indices = @transform_2, window_bounds = array<i64: 128, 1>}, {pipeline_mode = #tpu.pipeline_mode<synchronous>, transform_indices = @transform_3, window_bounds = array<i64: 128, 128>}, {pipeline_mode = #tpu.pipeline_mode<synchronous>, transform_indices = @transform_4, window_bounds = array<i64: 1, 128>}, {pipeline_mode = #tpu.pipeline_mode<synchronous>, transform_indices = @transform_5, window_bounds = array<i64: 128, 128>}, {pipeline_mode = #tpu.pipeline_mode<synchronous>, transform_indices = @transform_6, window_bounds = array<i64: 1, 128>}, {transform_indices = @transform_7, window_bounds = array<i64: 128, 128>}]} {
    %c0 = arith.constant 0 : index
    %c0_0 = arith.constant 0 : index
    %0 = vector.load %arg2[%c0, %c0_0] : memref<128x128xf32, #tpu.memory_space<vmem>>, vector<128x128xf32>
    %c0_1 = arith.constant 0 : index
    %c0_2 = arith.constant 0 : index
    %1 = vector.load %arg4[%c0_1, %c0_2] : memref<128x128xf32, #tpu.memory_space<vmem>>, vector<128x128xf32>
    %cst = arith.constant dense<0.000000e+00> : vector<128x128xf32>
    %2 = tpu.matmul %0, %1, %cst {dimension_numbers = #tpu.dot_dimension_numbers<[1], [0], [0], [1], [0, 0, 1, 1], [], []>} : vector<128x128xf32>, vector<128x128xf32>, vector<128x128xf32> -> vector<128x128xf32>
    %c0_3 = arith.constant 0 : index
    %c0_4 = arith.constant 0 : index
    %3 = vector.load %arg5[%c0_3, %c0_4] : memref<1x128xf32, #tpu.memory_space<vmem>>, vector<1x128xf32>
    %4 = vector.broadcast %3 : vector<1x128xf32> to vector<128x128xf32>
    %5 = arith.addf %2, %4 : vector<128x128xf32>
    %cst_5 = arith.constant 0.000000e+00 : f32
    %6 = vector.broadcast %cst_5 : f32 to vector<128x128xf32>
    %7 = arith.maximumf %5, %6 : vector<128x128xf32>
    %c0_6 = arith.constant 0 : index
    %c0_7 = arith.constant 0 : index
    %8 = vector.load %arg6[%c0_6, %c0_7] : memref<128x128xf32, #tpu.memory_space<vmem>>, vector<128x128xf32>
    %cst_8 = arith.constant dense<0.000000e+00> : vector<128x128xf32>
    %9 = tpu.matmul %7, %8, %cst_8 {dimension_numbers = #tpu.dot_dimension_numbers<[1], [0], [0], [1], [0, 0, 1, 1], [], []>} : vector<128x128xf32>, vector<128x128xf32>, vector<128x128xf32> -> vector<128x128xf32>
    %c0_9 = arith.constant 0 : index
    %c0_10 = arith.constant 0 : index
    %10 = vector.load %arg7[%c0_9, %c0_10] : memref<1x128xf32, #tpu.memory_space<vmem>>, vector<1x128xf32>
    %11 = vector.broadcast %10 : vector<1x128xf32> to vector<128x128xf32>
    %12 = arith.addf %9, %11 : vector<128x128xf32>
    %c0_11 = arith.constant 0 : index
    %c0_12 = arith.constant 0 : index
    %13 = vector.load %arg1[%c0_11, %c0_12] : memref<16x128xf32, #tpu.memory_space<vmem>>, vector<16x128xf32>
    %c0_13 = arith.constant 0 : index
    %c0_14 = arith.constant 0 : index
    %14 = vector.load %arg3[%c0_13, %c0_14] : memref<128x1xi32, #tpu.memory_space<vmem>>, vector<128x1xi32>
    %15 = tpu.iota {dimensions = array<i32: 1>} : vector<128x16xi32>
    %16 = vector.broadcast %14 : vector<128x1xi32> to vector<128x16xi32>
    %17 = arith.cmpi eq, %15, %16 : vector<128x16xi32>
    %18 = arith.extui %17 : vector<128x16xi1> to vector<128x16xi32>
    %19 = arith.sitofp %18 : vector<128x16xi32> to vector<128x16xf32>
    %cst_15 = arith.constant dense<0.000000e+00> : vector<128x128xf32>
    %20 = tpu.matmul %19, %13, %cst_15 {dimension_numbers = #tpu.dot_dimension_numbers<[1], [0], [0], [1], [0, 0, 1, 1], [], []>} : vector<128x16xf32>, vector<16x128xf32>, vector<128x128xf32> -> vector<128x128xf32>
    %21 = arith.addf %20, %12 : vector<128x128xf32>
    %cst_16 = arith.constant 0.000000e+00 : f32
    %22 = vector.broadcast %cst_16 : f32 to vector<128x128xf32>
    %23 = arith.maximumf %21, %22 : vector<128x128xf32>
    %c0_17 = arith.constant 0 : index
    %c0_18 = arith.constant 0 : index
    %24 = vector.load %arg8[%c0_17, %c0_18] : memref<128x128xf32, #tpu.memory_space<vmem>>, vector<128x128xf32>
    tpu.vector_store %arg8[%c0_17, %c0_18], %23 {strides = array<i32>} : memref<128x128xf32, #tpu.memory_space<vmem>>, vector<128x128xf32>,
    return
  }
  func.func @transform_0(%arg0: i32) -> (i32, i32) {
    %c0_i32 = arith.constant 0 : i32
    %c0_i32_0 = arith.constant 0 : i32
    %c0_i32_1 = arith.constant 0 : i32
    return %c0_i32, %c0_i32_0 : i32, i32
  }
  func.func @transform_1(%arg0: i32) -> (i32, i32) {
    %c0_i32 = arith.constant 0 : i32
    %c0_i32_0 = arith.constant 0 : i32
    return %arg0, %c0_i32 : i32, i32
  }
  func.func @transform_2(%arg0: i32) -> (i32, i32) {
    %c0_i32 = arith.constant 0 : i32
    %c0_i32_0 = arith.constant 0 : i32
    return %arg0, %c0_i32 : i32, i32
  }
  func.func @transform_3(%arg0: i32) -> (i32, i32) {
    %c0_i32 = arith.constant 0 : i32
    %c0_i32_0 = arith.constant 0 : i32
    %c0_i32_1 = arith.constant 0 : i32
    return %c0_i32, %c0_i32_0 : i32, i32
  }
  func.func @transform_4(%arg0: i32) -> (i32, i32) {
    %c0_i32 = arith.constant 0 : i32
    %c0_i32_0 = arith.constant 0 : i32
    %c0_i32_1 = arith.constant 0 : i32
    return %c0_i32, %c0_i32_0 : i32, i32
  }
  func.func @transform_5(%arg0: i32) -> (i32, i32) {
    %c0_i32 = arith.constant 0 : i32
    %c0_i32_0 = arith.constant 0 : i32
    %c0_i32_1 = arith.constant 0 : i32
    return %c0_i32, %c0_i32_0 : i32, i32
  }
  func.func @transform_6(%arg0: i32) -> (i32, i32) {
    %c0_i32 = arith.constant 0 : i32
    %c0_i32_0 = arith.constant 0 : i32
    %c0_i32_1 = arith.constant 0 : i32
    return %c0_i32, %c0_i32_0 : i32, i32
  }
  func.func @transform_7(%arg0: i32) -> (i32, i32) {
    %c0_i32 = arith.constant 0 : i32
    %c0_i32_0 = arith.constant 0 : i32
    return %arg0, %c0_i32 : i32, i32
  }
}

</mosaic_0001>

<llo_original>
// kernel: tpu_custom_call.1
$region0: #{tpu_custom_call.1}
  #allocation0 [shape = 'u32[]', space=smem, size = 0x4, offset = 0x4, fixed_abs, tag = 'smem constant byte address 0x4 - core index']
  #allocation1 [shape = 'u32[72,128]{1,0:T(1,128)}', space=vmem, size = 0x9000, scoped, tag = 'internal scratch']
  %s0 = inlined_call_operand.hbm [shape: f32[16,128], index: 0, kind: input, shape index: {}]
  %s1 = inlined_call_operand.vmem [shape: f32[128,128], index: 1, kind: input, shape index: {}]
  %s2 = inlined_call_operand.vmem [shape: s32[128,1], index: 2, kind: input, shape index: {}]
  %s3 = inlined_call_operand.hbm [shape: f32[128,128], index: 3, kind: input, shape index: {}]
  %s4 = inlined_call_operand.vmem [shape: f32[1,128], index: 4, kind: input, shape index: {}]
  %s5 = inlined_call_operand.hbm [shape: f32[128,128], index: 5, kind: input, shape index: {}]
  %s6 = inlined_call_operand.vmem [shape: f32[1,128], index: 6, kind: input, shape index: {}]
  %s7 = inlined_call_operand.hbm [shape: f32[128,128], index: 7, kind: output, shape index: {}]
  %s8 = sld [smem:[#allocation0]]
  $region50: #{tpu_custom_call.1} parent=0
    _
  %s10 = ssub.s32 1, %s8
  %s11 = scalar_select 0, %s10, %s8
  $region1: #{tpu_custom_call.1} parent=0
    #allocation2 [shape = 'u8[8192]{0}', space=vmem, size = 0x2000, scoped, tag = 'input window, operand 0, single buffered']
    #allocation3 [shape = 's32[1]{0}', space=sflag, size = 0x4, scoped, tag = 'scoped memory for tpu_custom_call.1']
    #allocation4 [shape = 's32[1]{0}', space=sflag, size = 0x4, scoped, tag = 'scoped memory for tpu_custom_call.1']
    #allocation5 [shape = 'u8[65536]{0}', space=vmem, size = 0x10000, scoped, tag = 'input window, operand 3, single buffered']
    #allocation6 [shape = 's32[1]{0}', space=sflag, size = 0x4, scoped, tag = 'scoped memory for tpu_custom_call.1']
    #allocation7 [shape = 'u8[65536]{0}', space=vmem, size = 0x10000, scoped, tag = 'input window, operand 5, single buffered']
    #allocation8 [shape = 'u8[65536]{0}', space=vmem, size = 0x10000, scoped, tag = 'output window, operand 0, single buffered']
    %12 = vsyncpa [#allocation3], 0
    %13 = vsyncpa [#allocation6], 0
    %14 = vsyncpa [#allocation4], 0
    // Predicated region
    $region2: #{tpu_custom_call.1} parent=1 // pred_check
      _
    $region3: #{tpu_custom_call.1} parent=1 // pred_check_branch
      %16 = sbr.rel (0) target = $region5
    $region4: #{tpu_custom_call.1} parent=1 // pred_region
      %18 = vsyncadd [#allocation3], 0
      %s19 = sshll.u32 %s0, 4
      %s20 = int_to_ptr.hbm [resolvable:$true] %s19
      %s21 = sshll.u32 [#allocation2], 4
      %s22 = int_to_ptr.vmem [resolvable:$true] %s21
      %27 = dma.hbm_to_vmem [thread:$0]  %s20, 256, %s22, [#allocation3], 128, 128, 8
    $region5: #{tpu_custom_call.1} parent=1 // pred_fallthru
      _
    // Predicated region
    $region6: #{tpu_custom_call.1} parent=1 // pred_check
      _
    $region7: #{tpu_custom_call.1} parent=1 // pred_check_branch
      %29 = sbr.rel (0) target = $region9
    $region8: #{tpu_custom_call.1} parent=1 // pred_region
      _
    $region9: #{tpu_custom_call.1} parent=1 // pred_fallthru
      _
    // Predicated region
    $region10: #{tpu_custom_call.1} parent=1 // pred_check
      _
    $region11: #{tpu_custom_call.1} parent=1 // pred_check_branch
      %31 = sbr.rel (0) target = $region13
    $region12: #{tpu_custom_call.1} parent=1 // pred_region
      _
    $region13: #{tpu_custom_call.1} parent=1 // pred_fallthru
      _
    // Predicated region
    $region14: #{tpu_custom_call.1} parent=1 // pred_check
      _
    $region15: #{tpu_custom_call.1} parent=1 // pred_check_branch
      %33 = sbr.rel (0) target = $region17
    $region16: #{tpu_custom_call.1} parent=1 // pred_region
      %35 = vsyncadd [#allocation6], 0
      %s36 = sshll.u32 %s3, 4
      %s37 = int_to_ptr.hbm [resolvable:$true] %s36
      %s38 = sshll.u32 [#allocation5], 4
      %s39 = int_to_ptr.vmem [resolvable:$true] %s38
      %44 = dma.hbm_to_vmem [thread:$0]  %s37, 2048, %s39, [#allocation6], 128, 128, 8
    $region17: #{tpu_custom_call.1} parent=1 // pred_fallthru
      _
    // Predicated region
    $region18: #{tpu_custom_call.1} parent=1 // pred_check
      _
    $region19: #{tpu_custom_call.1} parent=1 // pred_check_branch
      %46 = sbr.rel (0) target = $region21
    $region20: #{tpu_custom_call.1} parent=1 // pred_region
      _
    $region21: #{tpu_custom_call.1} parent=1 // pred_fallthru
      _
    // Predicated region
    $region22: #{tpu_custom_call.1} parent=1 // pred_check
      _
    $region23: #{tpu_custom_call.1} parent=1 // pred_check_branch
      %48 = sbr.rel (0) target = $region25
    $region24: #{tpu_custom_call.1} parent=1 // pred_region
      %50 = vsyncadd [#allocation6], 0
      %s51 = sshll.u32 %s5, 4
      %s52 = int_to_ptr.hbm [resolvable:$true] %s51
      %s53 = sshll.u32 [#allocation7], 4
      %s54 = int_to_ptr.vmem [resolvable:$true] %s53
      %59 = dma.hbm_to_vmem [thread:$0]  %s52, 2048, %s54, [#allocation6], 128, 128, 8
    $region25: #{tpu_custom_call.1} parent=1 // pred_fallthru
      _
    // Predicated region
    $region26: #{tpu_custom_call.1} parent=1 // pred_check
      _
    $region27: #{tpu_custom_call.1} parent=1 // pred_check_branch
      %61 = sbr.rel (0) target = $region29
    $region28: #{tpu_custom_call.1} parent=1 // pred_region
      _
    $region29: #{tpu_custom_call.1} parent=1 // pred_fallthru
      _
    // Predicated region
    $region30: #{tpu_custom_call.1} parent=1 // pred_check
      _
    $region31: #{tpu_custom_call.1} parent=1 // pred_check_branch
      %63 = sbr.rel (0) target = $region33
    $region32: #{tpu_custom_call.1} parent=1 // pred_region
      %65 = dma.done [#allocation3], 256
    $region33: #{tpu_custom_call.1} parent=1 // pred_fallthru
      _
    // Predicated region
    $region34: #{tpu_custom_call.1} parent=1 // pred_check
      _
    $region35: #{tpu_custom_call.1} parent=1 // pred_check_branch
      %67 = sbr.rel (0) target = $region37
    $region36: #{tpu_custom_call.1} parent=1 // pred_region
      %69 = dma.done [#allocation6], 2048
    $region37: #{tpu_custom_call.1} parent=1 // pred_fallthru
      _
    // Predicated region
    $region38: #{tpu_custom_call.1} parent=1 // pred_check
      _
    $region39: #{tpu_custom_call.1} parent=1 // pred_check_branch
      %71 = sbr.rel (0) target = $region41
    $region40: #{tpu_custom_call.1} parent=1 // pred_region
      %73 = dma.done [#allocation6], 2048
    $region41: #{tpu_custom_call.1} parent=1 // pred_fallthru
      _
    %v74 = vld [vmem:[%s1] sm:$0xff]
    %v75 = vld [vmem:[%s1 + $0x8] sm:$0xff]
    %v76 = vld [vmem:[%s1 + $0x10] sm:$0xff]
    %v77 = vld [vmem:[%s1 + $0x18] sm:$0xff]
    %v78 = vld [vmem:[%s1 + $0x20] sm:$0xff]
    %v79 = vld [vmem:[%s1 + $0x28] sm:$0xff]
    %v80 = vld [vmem:[%s1 + $0x30] sm:$0xff]
    %v81 = vld [vmem:[%s1 + $0x38] sm:$0xff]
    %v82 = vld [vmem:[%s1 + $0x40] sm:$0xff]
    %v83 = vld [vmem:[%s1 + $0x48] sm:$0xff]
    %v84 = vld [vmem:[%s1 + $0x50] sm:$0xff]
    %v85 = vld [vmem:[%s1 + $0x58] sm:$0xff]
    %v86 = vld [vmem:[%s1 + $0x60] sm:$0xff]
    %v87 = vld [vmem:[%s1 + $0x68] sm:$0xff]
    %v88 = vld [vmem:[%s1 + $0x70] sm:$0xff]
    %v89 = vld [vmem:[%s1 + $0x78] sm:$0xff]
    %v90 = vld [vmem:[#allocation5] sm:$0xff]
    %v91 = vld [vmem:[#allocation5 + $0x8] sm:$0xff]
    %v92 = vld [vmem:[#allocation5 + $0x10] sm:$0xff]
    %v93 = vld [vmem:[#allocation5 + $0x18] sm:$0xff]
    %v94 = vld [vmem:[#allocation5 + $0x20] sm:$0xff]
    %v95 = vld [vmem:[#allocation5 + $0x28] sm:$0xff]
    %v96 = vld [vmem:[#allocation5 + $0x30] sm:$0xff]
    %v97 = vld [vmem:[#allocation5 + $0x38] sm:$0xff]
    %v98 = vld [vmem:[#allocation5 + $0x40] sm:$0xff]
    %v99 = vld [vmem:[#allocation5 + $0x48] sm:$0xff]
    %v100 = vld [vmem:[#allocation5 + $0x50] sm:$0xff]
    %v101 = vld [vmem:[#allocation5 + $0x58] sm:$0xff]
    %v102 = vld [vmem:[#allocation5 + $0x60] sm:$0xff]
    %v103 = vld [vmem:[#allocation5 + $0x68] sm:$0xff]
    %v104 = vld [vmem:[#allocation5 + $0x70] sm:$0xff]
    %v105 = vld [vmem:[#allocation5 + $0x78] sm:$0xff]
    %v106 = vld [vmem:[%s4] sm:$0x1]
    %v108 = vperm.slane %v106, 0
    %110 = vmatpush.msra.mxu0 %v105
    %111 = vmatpush.msra.mxu0 %v104
    %112 = vmatpush.msra.mxu0 %v103
    %113 = vmatpush.msra.mxu0 %v102
    %114 = vmatpush.msra.mxu0 %v101
    %115 = vmatpush.msra.mxu0 %v100
    %116 = vmatpush.msra.mxu0 %v99
    %117 = vmatpush.msra.mxu0 %v98
    %118 = vmatpush.msra.mxu0 %v97
    %119 = vmatpush.msra.mxu0 %v96
    %120 = vmatpush.msra.mxu0 %v95
    %121 = vmatpush.msra.mxu0 %v94
    %122 = vmatpush.msra.mxu0 %v93
    %123 = vmatpush.msra.mxu0 %v92
    %124 = vmatpush.msra.mxu0 %v91
    %125 = vmatpush.msra.mxu0 %v90
    %126 = vmatmul.f32.gmra.mxu0 %v74
    %v127 = vpop.f32.mrf.mxu0
    %v128 = vadd.f32 %v108, %v127
    %129 = vmatmul.f32.gmra.mxu0 %v75
    %v130 = vpop.f32.mrf.mxu0
    %v131 = vadd.f32 %v108, %v130
    %132 = vmatmul.f32.gmra.mxu0 %v76
    %v133 = vpop.f32.mrf.mxu0
    %v134 = vadd.f32 %v108, %v133
    %135 = vmatmul.f32.gmra.mxu0 %v77
    %v136 = vpop.f32.mrf.mxu0
    %v137 = vadd.f32 %v108, %v136
    %138 = vmatmul.f32.gmra.mxu0 %v78
    %v139 = vpop.f32.mrf.mxu0
    %v140 = vadd.f32 %v108, %v139
    %141 = vmatmul.f32.gmra.mxu0 %v79
    %v142 = vpop.f32.mrf.mxu0
    %v143 = vadd.f32 %v108, %v142
    %144 = vmatmul.f32.gmra.mxu0 %v80
    %v145 = vpop.f32.mrf.mxu0
    %v146 = vadd.f32 %v108, %v145
    %147 = vmatmul.f32.gmra.mxu0 %v81
    %v148 = vpop.f32.mrf.mxu0
    %v149 = vadd.f32 %v108, %v148
    %150 = vmatmul.f32.gmra.mxu0 %v82
    %v151 = vpop.f32.mrf.mxu0
    %v152 = vadd.f32 %v108, %v151
    %153 = vmatmul.f32.gmra.mxu0 %v83
    %v154 = vpop.f32.mrf.mxu0
    %v155 = vadd.f32 %v108, %v154
    %156 = vmatmul.f32.gmra.mxu0 %v84
    %v157 = vpop.f32.mrf.mxu0
    %v158 = vadd.f32 %v108, %v157
    %159 = vmatmul.f32.gmra.mxu0 %v85
    %v160 = vpop.f32.mrf.mxu0
    %v161 = vadd.f32 %v108, %v160
    %162 = vmatmul.f32.gmra.mxu0 %v86
    %v163 = vpop.f32.mrf.mxu0
    %v164 = vadd.f32 %v108, %v163
    %165 = vmatmul.f32.gmra.mxu0 %v87
    %v166 = vpop.f32.mrf.mxu0
    %v167 = vadd.f32 %v108, %v166
    %168 = vmatmul.f32.gmra.mxu0 %v88
    %v169 = vpop.f32.mrf.mxu0
    %v170 = vadd.f32 %v108, %v169
    %171 = vmatmul.f32.gmra.mxu0 %v89
    %v172 = vpop.f32.mrf.mxu0
    %v173 = vadd.f32 %v108, %v172
    %174 = vdwg.mxu0
    %v175 = vmax.f32 %v128, 0.0
    %v176 = vmax.f32 %v131, 0.0
    %v177 = vmax.f32 %v134, 0.0
    %v178 = vmax.f32 %v137, 0.0
    %v179 = vmax.f32 %v140, 0.0
    %v180 = vmax.f32 %v143, 0.0
    %v181 = vmax.f32 %v146, 0.0
    %v182 = vmax.f32 %v149, 0.0
    %v183 = vmax.f32 %v152, 0.0
    %v184 = vmax.f32 %v155, 0.0
    %v185 = vmax.f32 %v158, 0.0
    %v186 = vmax.f32 %v161, 0.0
    %v187 = vmax.f32 %v164, 0.0
    %v188 = vmax.f32 %v167, 0.0
    %v189 = vmax.f32 %v170, 0.0
    %v190 = vmax.f32 %v173, 0.0
    %v191 = vld [vmem:[#allocation7] sm:$0xff]
    %v192 = vld [vmem:[#allocation7 + $0x8] sm:$0xff]
    %v193 = vld [vmem:[#allocation7 + $0x10] sm:$0xff]
    %v194 = vld [vmem:[#allocation7 + $0x18] sm:$0xff]
    %v195 = vld [vmem:[#allocation7 + $0x20] sm:$0xff]
    %v196 = vld [vmem:[#allocation7 + $0x28] sm:$0xff]
    %v197 = vld [vmem:[#allocation7 + $0x30] sm:$0xff]
    %v198 = vld [vmem:[#allocation7 + $0x38] sm:$0xff]
    %v199 = vld [vmem:[#allocation7 + $0x40] sm:$0xff]
    %v200 = vld [vmem:[#allocation7 + $0x48] sm:$0xff]
    %v201 = vld [vmem:[#allocation7 + $0x50] sm:$0xff]
    %v202 = vld [vmem:[#allocation7 + $0x58] sm:$0xff]
    %v203 = vld [vmem:[#allocation7 + $0x60] sm:$0xff]
    %v204 = vld [vmem:[#allocation7 + $0x68] sm:$0xff]
    %v205 = vld [vmem:[#allocation7 + $0x70] sm:$0xff]
    %v206 = vld [vmem:[#allocation7 + $0x78] sm:$0xff]
    %v207 = vld [vmem:[%s6] sm:$0x1]
    %v209 = vperm.slane %v207, 0
    %211 = vmatpush.msra.mxu0 %v206
    %212 = vmatpush.msra.mxu0 %v205
    %213 = vmatpush.msra.mxu0 %v204
    %214 = vmatpush.msra.mxu0 %v203
    %215 = vmatpush.msra.mxu0 %v202
    %216 = vmatpush.msra.mxu0 %v201
    %217 = vmatpush.msra.mxu0 %v200
    %218 = vmatpush.msra.mxu0 %v199
    %219 = vmatpush.msra.mxu0 %v198
    %220 = vmatpush.msra.mxu0 %v197
    %221 = vmatpush.msra.mxu0 %v196
    %222 = vmatpush.msra.mxu0 %v195
    %223 = vmatpush.msra.mxu0 %v194
    %224 = vmatpush.msra.mxu0 %v193
    %225 = vmatpush.msra.mxu0 %v192
    %226 = vmatpush.msra.mxu0 %v191
    %227 = vmatmul.f32.gmra.mxu0 %v175
    %v228 = vpop.f32.mrf.mxu0
    %v229 = vadd.f32 %v209, %v228
    %230 = vmatmul.f32.gmra.mxu0 %v176
    %v231 = vpop.f32.mrf.mxu0
    %v232 = vadd.f32 %v209, %v231
    %233 = vmatmul.f32.gmra.mxu0 %v177
    %v234 = vpop.f32.mrf.mxu0
    %v235 = vadd.f32 %v209, %v234
    %236 = vmatmul.f32.gmra.mxu0 %v178
    %v237 = vpop.f32.mrf.mxu0
    %v238 = vadd.f32 %v209, %v237
    %239 = vmatmul.f32.gmra.mxu0 %v179
    %v240 = vpop.f32.mrf.mxu0
    %v241 = vadd.f32 %v209, %v240
    %242 = vmatmul.f32.gmra.mxu0 %v180
    %v243 = vpop.f32.mrf.mxu0
    %v244 = vadd.f32 %v209, %v243
    %245 = vmatmul.f32.gmra.mxu0 %v181
    %v246 = vpop.f32.mrf.mxu0
    %v247 = vadd.f32 %v209, %v246
    %248 = vmatmul.f32.gmra.mxu0 %v182
    %v249 = vpop.f32.mrf.mxu0
    %v250 = vadd.f32 %v209, %v249
    %251 = vmatmul.f32.gmra.mxu0 %v183
    %v252 = vpop.f32.mrf.mxu0
    %v253 = vadd.f32 %v209, %v252
    %254 = vmatmul.f32.gmra.mxu0 %v184
    %v255 = vpop.f32.mrf.mxu0
    %v256 = vadd.f32 %v209, %v255
    %257 = vmatmul.f32.gmra.mxu0 %v185
    %v258 = vpop.f32.mrf.mxu0
    %v259 = vadd.f32 %v209, %v258
    %260 = vmatmul.f32.gmra.mxu0 %v186
    %v261 = vpop.f32.mrf.mxu0
    %v262 = vadd.f32 %v209, %v261
    %263 = vmatmul.f32.gmra.mxu0 %v187
    %v264 = vpop.f32.mrf.mxu0
    %v265 = vadd.f32 %v209, %v264
    %266 = vmatmul.f32.gmra.mxu0 %v188
    %v267 = vpop.f32.mrf.mxu0
    %v268 = vadd.f32 %v209, %v267
    %269 = vmatmul.f32.gmra.mxu0 %v189
    %v270 = vpop.f32.mrf.mxu0
    %v271 = vadd.f32 %v209, %v270
    %272 = vmatmul.f32.gmra.mxu0 %v190
    %v273 = vpop.f32.mrf.mxu0
    %v274 = vadd.f32 %v209, %v273
    %275 = vdwg.mxu0
    %v276 = vld [vmem:[#allocation2] sm:$0xff]
    %v277 = vld [vmem:[#allocation2 + $0x8] sm:$0xff]
    %v278 = vld [vmem:[%s2] sm:$0xff]
    %v279 = vld [vmem:[%s2 + $0x8] sm:$0xff]
    %v280 = vld [vmem:[%s2 + $0x10] sm:$0xff]
    %v281 = vld [vmem:[%s2 + $0x18] sm:$0xff]
    %v282 = vld [vmem:[%s2 + $0x20] sm:$0xff]
    %v283 = vld [vmem:[%s2 + $0x28] sm:$0xff]
    %v284 = vld [vmem:[%s2 + $0x30] sm:$0xff]
    %v285 = vld [vmem:[%s2 + $0x38] sm:$0xff]
    %v286 = vld [vmem:[%s2 + $0x40] sm:$0xff]
    %v287 = vld [vmem:[%s2 + $0x48] sm:$0xff]
    %v288 = vld [vmem:[%s2 + $0x50] sm:$0xff]
    %v289 = vld [vmem:[%s2 + $0x58] sm:$0xff]
    %v290 = vld [vmem:[%s2 + $0x60] sm:$0xff]
    %v291 = vld [vmem:[%s2 + $0x68] sm:$0xff]
    %v292 = vld [vmem:[%s2 + $0x70] sm:$0xff]
    %v293 = vld [vmem:[%s2 + $0x78] sm:$0xff]
    %v294 = vlaneseq
    %v295 = vand.u32 %v294, 127
    %296 = vset.pattern.permute.xlu0 0
    %297 = vperm.xlu0 %296, %v278
    %v298 = vpop.permute.xlu0 %297
    %299 = vset.pattern.permute.xlu0 0
    %300 = vperm.xlu0 %299, %v279
    %v301 = vpop.permute.xlu0 %300
    %302 = vset.pattern.permute.xlu0 0
    %303 = vperm.xlu0 %302, %v280
    %v304 = vpop.permute.xlu0 %303
    %305 = vset.pattern.permute.xlu0 0
    %306 = vperm.xlu0 %305, %v281
    %v307 = vpop.permute.xlu0 %306
    %308 = vset.pattern.permute.xlu0 0
    %309 = vperm.xlu0 %308, %v282
    %v310 = vpop.permute.xlu0 %309
    %311 = vset.pattern.permute.xlu0 0
    %312 = vperm.xlu0 %311, %v283
    %v313 = vpop.permute.xlu0 %312
    %314 = vset.pattern.permute.xlu0 0
    %315 = vperm.xlu0 %314, %v284
    %v316 = vpop.permute.xlu0 %315
    %317 = vset.pattern.permute.xlu0 0
    %318 = vperm.xlu0 %317, %v285
    %v319 = vpop.permute.xlu0 %318
    %320 = vset.pattern.permute.xlu0 0
    %321 = vperm.xlu0 %320, %v286
    %v322 = vpop.permute.xlu0 %321
    %323 = vset.pattern.permute.xlu0 0
    %324 = vperm.xlu0 %323, %v287
    %v325 = vpop.permute.xlu0 %324
    %326 = vset.pattern.permute.xlu0 0
    %327 = vperm.xlu0 %326, %v288
    %v328 = vpop.permute.xlu0 %327
    %329 = vset.pattern.permute.xlu0 0
    %330 = vperm.xlu0 %329, %v289
    %v331 = vpop.permute.xlu0 %330
    %332 = vset.pattern.permute.xlu0 0
    %333 = vperm.xlu0 %332, %v290
    %v334 = vpop.permute.xlu0 %333
    %335 = vset.pattern.permute.xlu0 0
    %336 = vperm.xlu0 %335, %v291
    %v337 = vpop.permute.xlu0 %336
    %338 = vset.pattern.permute.xlu0 0
    %339 = vperm.xlu0 %338, %v292
    %v340 = vpop.permute.xlu0 %339
    %341 = vset.pattern.permute.xlu0 0
    %342 = vperm.xlu0 %341, %v293
    %v343 = vpop.permute.xlu0 %342
    %vm344 = vcmp.eq.s32.totalorder %v295, %v298
    %vm345 = vcmp.eq.s32.totalorder %v295, %v301
    %vm346 = vcmp.eq.s32.totalorder %v295, %v304
    %vm347 = vcmp.eq.s32.totalorder %v295, %v307
    %vm348 = vcmp.eq.s32.totalorder %v295, %v310
    %vm349 = vcmp.eq.s32.totalorder %v295, %v313
    %vm350 = vcmp.eq.s32.totalorder %v295, %v316
    %vm351 = vcmp.eq.s32.totalorder %v295, %v319
    %vm352 = vcmp.eq.s32.totalorder %v295, %v322
    %vm353 = vcmp.eq.s32.totalorder %v295, %v325
    %vm354 = vcmp.eq.s32.totalorder %v295, %v328
    %vm355 = vcmp.eq.s32.totalorder %v295, %v331
    %vm356 = vcmp.eq.s32.totalorder %v295, %v334
    %vm357 = vcmp.eq.s32.totalorder %v295, %v337
    %vm358 = vcmp.eq.s32.totalorder %v295, %v340
    %vm359 = vcmp.eq.s32.totalorder %v295, %v343
    %v360 = vsel %vm344, 1, 0
    %v361 = vsel %vm345, 1, 0
    %v362 = vsel %vm346, 1, 0
    %v363 = vsel %vm347, 1, 0
    %v364 = vsel %vm348, 1, 0
    %v365 = vsel %vm349, 1, 0
    %v366 = vsel %vm350, 1, 0
    %v367 = vsel %vm351, 1, 0
    %v368 = vsel %vm352, 1, 0
    %v369 = vsel %vm353, 1, 0
    %v370 = vsel %vm354, 1, 0
    %v371 = vsel %vm355, 1, 0
    %v372 = vsel %vm356, 1, 0
    %v373 = vsel %vm357, 1, 0
    %v374 = vsel %vm358, 1, 0
    %v375 = vsel %vm359, 1, 0
    %v376 = vcvt.s32.f32 %v360
    %v377 = vcvt.s32.f32 %v361
    %v378 = vcvt.s32.f32 %v362
    %v379 = vcvt.s32.f32 %v363
    %v380 = vcvt.s32.f32 %v364
    %v381 = vcvt.s32.f32 %v365
    %v382 = vcvt.s32.f32 %v366
    %v383 = vcvt.s32.f32 %v367
    %v384 = vcvt.s32.f32 %v368
    %v385 = vcvt.s32.f32 %v369
    %v386 = vcvt.s32.f32 %v370
    %v387 = vcvt.s32.f32 %v371
    %v388 = vcvt.s32.f32 %v372
    %v389 = vcvt.s32.f32 %v373
    %v390 = vcvt.s32.f32 %v374
    %v391 = vcvt.s32.f32 %v375
    %vm392 = vcmask 130048
    %v394 = vsel %vm392, %v376, 0
    %v397 = vsel %vm392, %v377, 0
    %v400 = vsel %vm392, %v378, 0
    %v403 = vsel %vm392, %v379, 0
    %v406 = vsel %vm392, %v380, 0
    %v409 = vsel %vm392, %v381, 0
    %v412 = vsel %vm392, %v382, 0
    %v415 = vsel %vm392, %v383, 0
    %v418 = vsel %vm392, %v384, 0
    %v421 = vsel %vm392, %v385, 0
    %v424 = vsel %vm392, %v386, 0
    %v427 = vsel %vm392, %v387, 0
    %v430 = vsel %vm392, %v388, 0
    %v433 = vsel %vm392, %v389, 0
    %v436 = vsel %vm392, %v390, 0
    %v439 = vsel %vm392, %v391, 0
    %441 = vmatpush.msra.mxu0 0.0
    %442 = vmatpush.msra.mxu0 0.0
    %443 = vmatpush.msra.mxu0 0.0
    %444 = vmatpush.msra.mxu0 0.0
    %445 = vmatpush.msra.mxu0 0.0
    %446 = vmatpush.msra.mxu0 0.0
    %447 = vmatpush.msra.mxu0 0.0
    %448 = vmatpush.msra.mxu0 0.0
    %449 = vmatpush.msra.mxu0 0.0
    %450 = vmatpush.msra.mxu0 0.0
    %451 = vmatpush.msra.mxu0 0.0
    %452 = vmatpush.msra.mxu0 0.0
    %453 = vmatpush.msra.mxu0 0.0
    %454 = vmatpush.msra.mxu0 0.0
    %455 = vmatpush.msra.mxu0 %v277
    %456 = vmatpush.msra.mxu0 %v276
    %457 = vmatmul.f32.gmra.mxu0 %v394
    %v458 = vpop.f32.mrf.mxu0
    %v459 = vadd.f32 %v229, %v458
    %460 = vmatmul.f32.gmra.mxu0 %v397
    %v461 = vpop.f32.mrf.mxu0
    %v462 = vadd.f32 %v232, %v461
    %463 = vmatmul.f32.gmra.mxu0 %v400
    %v464 = vpop.f32.mrf.mxu0
    %v465 = vadd.f32 %v235, %v464
    %466 = vmatmul.f32.gmra.mxu0 %v403
    %v467 = vpop.f32.mrf.mxu0
    %v468 = vadd.f32 %v238, %v467
    %469 = vmatmul.f32.gmra.mxu0 %v406
    %v470 = vpop.f32.mrf.mxu0
    %v471 = vadd.f32 %v241, %v470
    %472 = vmatmul.f32.gmra.mxu0 %v409
    %v473 = vpop.f32.mrf.mxu0
    %v474 = vadd.f32 %v244, %v473
    %475 = vmatmul.f32.gmra.mxu0 %v412
    %v476 = vpop.f32.mrf.mxu0
    %v477 = vadd.f32 %v247, %v476
    %478 = vmatmul.f32.gmra.mxu0 %v415
    %v479 = vpop.f32.mrf.mxu0
    %v480 = vadd.f32 %v250, %v479
    %481 = vmatmul.f32.gmra.mxu0 %v418
    %v482 = vpop.f32.mrf.mxu0
    %v483 = vadd.f32 %v253, %v482
    %484 = vmatmul.f32.gmra.mxu0 %v421
    %v485 = vpop.f32.mrf.mxu0
    %v486 = vadd.f32 %v256, %v485
    %487 = vmatmul.f32.gmra.mxu0 %v424
    %v488 = vpop.f32.mrf.mxu0
    %v489 = vadd.f32 %v259, %v488
    %490 = vmatmul.f32.gmra.mxu0 %v427
    %v491 = vpop.f32.mrf.mxu0
    %v492 = vadd.f32 %v262, %v491
    %493 = vmatmul.f32.gmra.mxu0 %v430
    %v494 = vpop.f32.mrf.mxu0
    %v495 = vadd.f32 %v265, %v494
    %496 = vmatmul.f32.gmra.mxu0 %v433
    %v497 = vpop.f32.mrf.mxu0
    %v498 = vadd.f32 %v268, %v497
    %499 = vmatmul.f32.gmra.mxu0 %v436
    %v500 = vpop.f32.mrf.mxu0
    %v501 = vadd.f32 %v271, %v500
    %502 = vmatmul.f32.gmra.mxu0 %v439
    %v503 = vpop.f32.mrf.mxu0
    %v504 = vadd.f32 %v274, %v503
    %505 = vdwg.mxu0
    %v506 = vmax.f32 %v459, 0.0
    %v507 = vmax.f32 %v462, 0.0
    %v508 = vmax.f32 %v465, 0.0
    %v509 = vmax.f32 %v468, 0.0
    %v510 = vmax.f32 %v471, 0.0
    %v511 = vmax.f32 %v474, 0.0
    %v512 = vmax.f32 %v477, 0.0
    %v513 = vmax.f32 %v480, 0.0
    %v514 = vmax.f32 %v483, 0.0
    %v515 = vmax.f32 %v486, 0.0
    %v516 = vmax.f32 %v489, 0.0
    %v517 = vmax.f32 %v492, 0.0
    %v518 = vmax.f32 %v495, 0.0
    %v519 = vmax.f32 %v498, 0.0
    %v520 = vmax.f32 %v501, 0.0
    %v521 = vmax.f32 %v504, 0.0
    %522 = vst [vmem:[#allocation8] sm:$0xff] %v506
    %523 = vst [vmem:[#allocation8 + $0x8] sm:$0xff] %v507
    %524 = vst [vmem:[#allocation8 + $0x10] sm:$0xff] %v508
    %525 = vst [vmem:[#allocation8 + $0x18] sm:$0xff] %v509
    %526 = vst [vmem:[#allocation8 + $0x20] sm:$0xff] %v510
    %527 = vst [vmem:[#allocation8 + $0x28] sm:$0xff] %v511
    %528 = vst [vmem:[#allocation8 + $0x30] sm:$0xff] %v512
    %529 = vst [vmem:[#allocation8 + $0x38] sm:$0xff] %v513
    %530 = vst [vmem:[#allocation8 + $0x40] sm:$0xff] %v514
    %531 = vst [vmem:[#allocation8 + $0x48] sm:$0xff] %v515
    %532 = vst [vmem:[#allocation8 + $0x50] sm:$0xff] %v516
    %533 = vst [vmem:[#allocation8 + $0x58] sm:$0xff] %v517
    %534 = vst [vmem:[#allocation8 + $0x60] sm:$0xff] %v518
    %535 = vst [vmem:[#allocation8 + $0x68] sm:$0xff] %v519
    %536 = vst [vmem:[#allocation8 + $0x70] sm:$0xff] %v520
    %537 = vst [vmem:[#allocation8 + $0x78] sm:$0xff] %v521
    // Predicated region
    $region42: #{tpu_custom_call.1} parent=1 // pred_check
      _
    $region43: #{tpu_custom_call.1} parent=1 // pred_check_branch
      %539 = sbr.rel (0) target = $region45
    $region44: #{tpu_custom_call.1} parent=1 // pred_region
      %541 = vsyncadd [#allocation4], 0
      %s542 = sshll.u32 [#allocation8], 4
      %s543 = int_to_ptr.vmem [resolvable:$true] %s542
      %s544 = sshll.u32 %s7, 4
      %s545 = int_to_ptr.hbm [resolvable:$true] %s544
      %550 = dma.vmem_to_hbm [thread:$0]  %s543, 2048, %s545, [#allocation4], 128, 128, 8
    $region45: #{tpu_custom_call.1} parent=1 // pred_fallthru
      _
    // Predicated region
    $region46: #{tpu_custom_call.1} parent=1 // pred_check
      _
    $region47: #{tpu_custom_call.1} parent=1 // pred_check_branch
      %552 = sbr.rel (0) target = $region49
    $region48: #{tpu_custom_call.1} parent=1 // pred_region
      %554 = dma.done [#allocation4], 2048
    $region49: #{tpu_custom_call.1} parent=1 // pred_fallthru
      _
    %555 = vsyncpa [#allocation3], 1
    %556 = vsyncpa [#allocation6], 1
    %557 = vsyncpa [#allocation4], 1

</llo_original>
